<compile_context>
chip_gen: v5e
topology: v5e:2x2
jax: 0.10.0
libtpu: 0.0.40
codegen_flags: <defaults>
</compile_context>

<pallas_src>
import functools

import jax
import jax.numpy as jnp
from jax.experimental import pallas as pl
from jax.experimental.pallas import tpu as pltpu


# ----------------------------------------------------------------------------
# Fused whole-forward Pallas kernel
# ----------------------------------------------------------------------------
def _vae_fwd_kernel(x_ref, eps_ref,
                    w1_ref, b1_ref, w2_ref, b2_ref, w3_ref, b3_ref,
                    w4_ref, b4_ref, w5_ref, b5_ref, w6_ref, b6_ref,
                    recon_ref, enc_ref, *, enc_dim):
    f32 = jnp.float32

    def dense(h, w_ref, b_ref, relu):
        y = jnp.dot(h, w_ref[...], preferred_element_type=f32) + b_ref[...]
        if relu:
            y = jnp.maximum(y, 0.0)
        return y

    # Encoder.
    x = x_ref[...].astype(f32)
    h = dense(x, w1_ref, b1_ref, True)
    h = dense(h, w2_ref, b2_ref, True)
    e = dense(h, w3_ref, b3_ref, False)          # (tb, 2*enc_dim)

    # Reparameterized sample: mean + exp(log_std) * eps.
    mean = e[:, :enc_dim]
    log_std = e[:, enc_dim:]
    sample = mean + jnp.exp(log_std) * eps_ref[...].astype(f32)

    # Decoder.
    d = dense(sample, w4_ref, b4_ref, True)
    d = dense(d, w5_ref, b5_ref, True)
    recon = dense(d, w6_ref, b6_ref, False)

    recon_ref[...] = recon.astype(recon_ref.dtype)
    enc_ref[...] = e.astype(enc_ref.dtype)       # single lane-dense (tb, 2E) store


# ----------------------------------------------------------------------------
# Tiling helpers
# ----------------------------------------------------------------------------
_MAX_TILE = 1024          # f32 x+recon tiles double-buffered ~16 MiB at tb=1024
_VMEM_CAP = 48 * 1024 * 1024   # stay well under v7x's 64 MiB physical VMEM


def _pick_batch_tile(batch):
    """Batch tile: multiple of 8, <= _MAX_TILE, and <= ceil(B/2) for B >= 16
    so the grid has at least 2 steps (keeps both v7x TensorCores busy)."""
    if batch <= 8:
        return 8
    half = -(-batch // 2)                # ceil(B/2)
    tb = ((half + 7) // 8) * 8           # round up to a multiple of 8
    return min(tb, _MAX_TILE)


def _vmem_limit_bytes(tb, D, E, layers):
    tile_bytes = tb * (2 * D + 3 * E) * 4          # x + recon + eps + enc_out
    w_bytes = sum(w.size + b.size for w, b in layers) * 4
    est = 2 * (tile_bytes + w_bytes) + (1 << 20)   # double-buffered + slack
    return int(min(max(2 * est, 32 * 1024 * 1024), _VMEM_CAP))


# ----------------------------------------------------------------------------
# Wrapper
# ----------------------------------------------------------------------------
def vae_forward(params, x_nchw, eps):
    """Forward pass of the VAE.  Returns (recon_logits, mean, log_std).

    torch.distributions.Normal cannot be returned from JAX; its parameters
    (mean, log_std) are returned instead and the rsample() draw is
    reparameterized with the externally supplied eps ~ N(0, 1).
    """
    B = x_nchw.shape[0]
    D = x_nchw.shape[1] * x_nchw.shape[2] * x_nchw.shape[3]
    E = eps.shape[1]
    x_flat = x_nchw.reshape(B, D)

    (w1, b1), (w2, b2), (w3, b3) = params["enc"]
    (w4, b4), (w5, b5), (w6, b6) = params["dec"]
    layers = ((w1, b1), (w2, b2), (w3, b3), (w4, b4), (w5, b5), (w6, b6))

    # Pad the batch up to a multiple of the tile (multiple of 8) so blocks are
    # always (8,128)-friendly and never fall back to one giant un-tiled block.
    tb = _pick_batch_tile(B)
    Bp = ((B + tb - 1) // tb) * tb
    if Bp != B:
        pad = Bp - B
        x_flat = jnp.pad(x_flat, ((0, pad), (0, 0)))
        eps = jnp.pad(eps, ((0, pad), (0, 0)))
    grid = (Bp // tb,)

    def row_map(i):
        return (i, 0)

    def full_map(i):
        return (0, 0)

    in_specs = [
        pl.BlockSpec((tb, D), row_map),          # x tile
        pl.BlockSpec((tb, E), row_map),          # eps tile
    ]
    args = [x_flat, eps]
    for w, b in layers:
        in_specs.append(pl.BlockSpec(w.shape, full_map))
        in_specs.append(pl.BlockSpec((1, b.shape[0]), full_map))
        args.append(w)
        args.append(b.reshape(1, -1))            # 2-D bias for broadcasting

    out_specs = (
        pl.BlockSpec((tb, D), row_map),          # recon tile
        pl.BlockSpec((tb, 2 * E), row_map),      # encoder head (mean | log_std)
    )
    out_shape = (
        jax.ShapeDtypeStruct((Bp, D), jnp.float32),
        jax.ShapeDtypeStruct((Bp, 2 * E), jnp.float32),
    )

    kernel = functools.partial(_vae_fwd_kernel, enc_dim=E)
    recon, enc_out = pl.pallas_call(
        kernel,
        out_shape=out_shape,
        grid=grid,
        in_specs=in_specs,
        out_specs=out_specs,
        compiler_params=pltpu.CompilerParams(
            dimension_semantics=("parallel",),
            vmem_limit_bytes=_vmem_limit_bytes(tb, D, E, layers)),
    )(*args)

    recon = recon[:B]
    enc_out = enc_out[:B]
    mean = enc_out[:, :E]
    log_std = enc_out[:, E:]
    return recon.reshape(x_nchw.shape), mean, log_std


# ----------------------------------------------------------------------------
# Pure-JAX reference (for correctness checking only)
# ----------------------------------------------------------------------------
def vae_forward_ref(params, x_nchw, eps):
    B = x_nchw.shape[0]
    x = x_nchw.reshape(B, -1)
    (w1, b1), (w2, b2), (w3, b3) = params["enc"]
    (w4, b4), (w5, b5), (w6, b6) = params["dec"]
    h = jax.nn.relu(x @ w1 + b1)
    h = jax.nn.relu(h @ w2 + b2)
    e = h @ w3 + b3
    E = e.shape[-1] // 2
    mean, log_std = e[:, :E], e[:, E:]
    sample = mean + jnp.exp(log_std) * eps
    d = jax.nn.relu(sample @ w4 + b4)
    d = jax.nn.relu(d @ w5 + b5)
    recon = d @ w6 + b6
    return recon.reshape(x_nchw.shape), mean, log_std


# ----------------------------------------------------------------------------
# Parameters (deterministic, synthetic; PyTorch Linear-style init)
# ----------------------------------------------------------------------------
def init_params(key, *, width, colorchs, enc_dim):
    D = colorchs * width * width
    enc_dims = [(D, 32), (32, 16), (16, 2 * enc_dim)]
    dec_dims = [(enc_dim, 16), (16, 32), (32, D)]

    def lin(k, fan_in, fan_out):
        k1, k2 = jax.random.split(k)
        s = 1.0 / jnp.sqrt(float(fan_in))
        w = jax.random.uniform(k1, (fan_in, fan_out), jnp.float32, -s, s)
        b = jax.random.uniform(k2, (fan_out,), jnp.float32, -s, s)
        return w, b

    keys = jax.random.split(key, 6)
    return {
        "enc": [lin(keys[i], *enc_dims[i]) for i in range(3)],
        "dec": [lin(keys[3 + i], *dec_dims[i]) for i in range(3)],
    }


if __name__ == "__main__":
    key = jax.random.PRNGKey(0)
    k_param, k_x, k_eps = jax.random.split(key, 3)

    batch, colorchs, width, enc_dim = 2, 4, 16, 8
    params = init_params(k_param, width=width, colorchs=colorchs,
                         enc_dim=enc_dim)
    x = jax.random.normal(k_x, (batch, colorchs, width, width), jnp.float32)
    eps = jax.random.normal(k_eps, (batch, enc_dim), jnp.float32)

    fwd = jax.jit(vae_forward)
    recon, mean, log_std = fwd(params, x, eps)
    recon, mean, log_std = jax.block_until_ready((recon, mean, log_std))

    assert recon.shape == x.shape, recon.shape
    assert mean.shape == (batch, enc_dim), mean.shape
    assert log_std.shape == (batch, enc_dim), log_std.shape
    assert bool(jnp.all(jnp.isfinite(recon)))
    assert bool(jnp.all(jnp.isfinite(mean)))
    assert bool(jnp.all(jnp.isfinite(log_std)))

    ref_recon, ref_mean, ref_logstd = vae_forward_ref(params, x, eps)
    assert bool(jnp.allclose(recon, ref_recon, atol=5e-2, rtol=5e-2))
    assert bool(jnp.allclose(mean, ref_mean, atol=5e-2, rtol=5e-2))
    assert bool(jnp.allclose(log_std, ref_logstd, atol=5e-2, rtol=5e-2))

    # TODO(synk): torch.distributions.Normal object and the optimizer/scheduler
    # state have no array equivalent; (mean, log_std) parameterize the dist.
    print("KERNEL_OK")
</pallas_src>

<mosaic_0001>
module attributes {stable_mosaic.version = 11 : i64} {
  func.func @_vae_fwd_kernel(%arg0: i32, %arg1: memref<8x1024xf32, #tpu.memory_space<vmem>>, %arg2: memref<8x8xf32, #tpu.memory_space<vmem>>, %arg3: memref<1024x32xf32, #tpu.memory_space<vmem>>, %arg4: memref<1x32xf32, #tpu.memory_space<vmem>>, %arg5: memref<32x16xf32, #tpu.memory_space<vmem>>, %arg6: memref<1x16xf32, #tpu.memory_space<vmem>>, %arg7: memref<16x16xf32, #tpu.memory_space<vmem>>, %arg8: memref<1x16xf32, #tpu.memory_space<vmem>>, %arg9: memref<8x16xf32, #tpu.memory_space<vmem>>, %arg10: memref<1x16xf32, #tpu.memory_space<vmem>>, %arg11: memref<16x32xf32, #tpu.memory_space<vmem>>, %arg12: memref<1x32xf32, #tpu.memory_space<vmem>>, %arg13: memref<32x1024xf32, #tpu.memory_space<vmem>>, %arg14: memref<1x1024xf32, #tpu.memory_space<vmem>>, %arg15: memref<8x1024xf32, #tpu.memory_space<vmem>>, %arg16: memref<8x16xf32, #tpu.memory_space<vmem>>) attributes {dimension_semantics = [#tpu.dimension_semantics<parallel>], iteration_bounds = array<i64: 1>, scalar_prefetch = 0 : i64, scratch_operands = 0 : i64, tpu.core_type = #tpu.core_type<tc>, window_params = [{transform_indices = @transform_0, window_bounds = array<i64: 8, 1024>}, {transform_indices = @transform_1, window_bounds = array<i64: 8, 8>}, {pipeline_mode = #tpu.pipeline_mode<synchronous>, transform_indices = @transform_2, window_bounds = array<i64: 1024, 32>}, {pipeline_mode = #tpu.pipeline_mode<synchronous>, transform_indices = @transform_3, window_bounds = array<i64: 1, 32>}, {pipeline_mode = #tpu.pipeline_mode<synchronous>, transform_indices = @transform_4, window_bounds = array<i64: 32, 16>}, {pipeline_mode = #tpu.pipeline_mode<synchronous>, transform_indices = @transform_5, window_bounds = array<i64: 1, 16>}, {pipeline_mode = #tpu.pipeline_mode<synchronous>, transform_indices = @transform_6, window_bounds = array<i64: 16, 16>}, {pipeline_mode = #tpu.pipeline_mode<synchronous>, transform_indices = @transform_7, window_bounds = array<i64: 1, 16>}, {pipeline_mode = #tpu.pipeline_mode<synchronous>, transform_indices = @transform_8, window_bounds = array<i64: 8, 16>}, {pipeline_mode = #tpu.pipeline_mode<synchronous>, transform_indices = @transform_9, window_bounds = array<i64: 1, 16>}, {pipeline_mode = #tpu.pipeline_mode<synchronous>, transform_indices = @transform_10, window_bounds = array<i64: 16, 32>}, {pipeline_mode = #tpu.pipeline_mode<synchronous>, transform_indices = @transform_11, window_bounds = array<i64: 1, 32>}, {pipeline_mode = #tpu.pipeline_mode<synchronous>, transform_indices = @transform_12, window_bounds = array<i64: 32, 1024>}, {pipeline_mode = #tpu.pipeline_mode<synchronous>, transform_indices = @transform_13, window_bounds = array<i64: 1, 1024>}, {transform_indices = @transform_14, window_bounds = array<i64: 8, 1024>}, {transform_indices = @transform_15, window_bounds = array<i64: 8, 16>}]} {
    %c0 = arith.constant 0 : index
    %c0_0 = arith.constant 0 : index
    %0 = vector.load %arg1[%c0, %c0_0] : memref<8x1024xf32, #tpu.memory_space<vmem>>, vector<8x1024xf32>
    %c0_1 = arith.constant 0 : index
    %c0_2 = arith.constant 0 : index
    %1 = vector.load %arg3[%c0_1, %c0_2] : memref<1024x32xf32, #tpu.memory_space<vmem>>, vector<1024x32xf32>
    %cst = arith.constant dense<0.000000e+00> : vector<8x32xf32>
    %2 = tpu.matmul %0, %1, %cst {dimension_numbers = #tpu.dot_dimension_numbers<[1], [0], [0], [1], [0, 0, 1, 1], [], []>} : vector<8x1024xf32>, vector<1024x32xf32>, vector<8x32xf32> -> vector<8x32xf32>
    %c0_3 = arith.constant 0 : index
    %c0_4 = arith.constant 0 : index
    %3 = vector.load %arg4[%c0_3, %c0_4] : memref<1x32xf32, #tpu.memory_space<vmem>>, vector<1x32xf32>
    %4 = vector.broadcast %3 : vector<1x32xf32> to vector<8x32xf32>
    %5 = arith.addf %2, %4 : vector<8x32xf32>
    %cst_5 = arith.constant 0.000000e+00 : f32
    %6 = vector.broadcast %cst_5 : f32 to vector<8x32xf32>
    %7 = arith.maximumf %5, %6 : vector<8x32xf32>
    %c0_6 = arith.constant 0 : index
    %c0_7 = arith.constant 0 : index
    %8 = vector.load %arg5[%c0_6, %c0_7] : memref<32x16xf32, #tpu.memory_space<vmem>>, vector<32x16xf32>
    %cst_8 = arith.constant dense<0.000000e+00> : vector<8x16xf32>
    %9 = tpu.matmul %7, %8, %cst_8 {dimension_numbers = #tpu.dot_dimension_numbers<[1], [0], [0], [1], [0, 0, 1, 1], [], []>} : vector<8x32xf32>, vector<32x16xf32>, vector<8x16xf32> -> vector<8x16xf32>
    %c0_9 = arith.constant 0 : index
    %c0_10 = arith.constant 0 : index
    %10 = vector.load %arg6[%c0_9, %c0_10] : memref<1x16xf32, #tpu.memory_space<vmem>>, vector<1x16xf32>
    %11 = vector.broadcast %10 : vector<1x16xf32> to vector<8x16xf32>
    %12 = arith.addf %9, %11 : vector<8x16xf32>
    %cst_11 = arith.constant 0.000000e+00 : f32
    %13 = vector.broadcast %cst_11 : f32 to vector<8x16xf32>
    %14 = arith.maximumf %12, %13 : vector<8x16xf32>
    %c0_12 = arith.constant 0 : index
    %c0_13 = arith.constant 0 : index
    %15 = vector.load %arg7[%c0_12, %c0_13] : memref<16x16xf32, #tpu.memory_space<vmem>>, vector<16x16xf32>
    %cst_14 = arith.constant dense<0.000000e+00> : vector<8x16xf32>
    %16 = tpu.matmul %14, %15, %cst_14 {dimension_numbers = #tpu.dot_dimension_numbers<[1], [0], [0], [1], [0, 0, 1, 1], [], []>} : vector<8x16xf32>, vector<16x16xf32>, vector<8x16xf32> -> vector<8x16xf32>
    %c0_15 = arith.constant 0 : index
    %c0_16 = arith.constant 0 : index
    %17 = vector.load %arg8[%c0_15, %c0_16] : memref<1x16xf32, #tpu.memory_space<vmem>>, vector<1x16xf32>
    %18 = vector.broadcast %17 : vector<1x16xf32> to vector<8x16xf32>
    %19 = arith.addf %16, %18 : vector<8x16xf32>
    %20 = vector.extract_strided_slice %19 {offsets = [0, 0], sizes = [8, 8], strides = [1, 1]} : vector<8x16xf32> to vector<8x8xf32>
    %21 = vector.extract_strided_slice %19 {offsets = [0, 8], sizes = [8, 8], strides = [1, 1]} : vector<8x16xf32> to vector<8x8xf32>
    %22 = math.exp %21 : vector<8x8xf32>
    %c0_17 = arith.constant 0 : index
    %c0_18 = arith.constant 0 : index
    %23 = vector.load %arg2[%c0_17, %c0_18] : memref<8x8xf32, #tpu.memory_space<vmem>>, vector<8x8xf32>
    %24 = arith.mulf %22, %23 : vector<8x8xf32>
    %25 = arith.addf %20, %24 : vector<8x8xf32>
    %c0_19 = arith.constant 0 : index
    %c0_20 = arith.constant 0 : index
    %26 = vector.load %arg9[%c0_19, %c0_20] : memref<8x16xf32, #tpu.memory_space<vmem>>, vector<8x16xf32>
    %cst_21 = arith.constant dense<0.000000e+00> : vector<8x16xf32>
    %27 = tpu.matmul %25, %26, %cst_21 {dimension_numbers = #tpu.dot_dimension_numbers<[1], [0], [0], [1], [0, 0, 1, 1], [], []>} : vector<8x8xf32>, vector<8x16xf32>, vector<8x16xf32> -> vector<8x16xf32>
    %c0_22 = arith.constant 0 : index
    %c0_23 = arith.constant 0 : index
    %28 = vector.load %arg10[%c0_22, %c0_23] : memref<1x16xf32, #tpu.memory_space<vmem>>, vector<1x16xf32>
    %29 = vector.broadcast %28 : vector<1x16xf32> to vector<8x16xf32>
    %30 = arith.addf %27, %29 : vector<8x16xf32>
    %cst_24 = arith.constant 0.000000e+00 : f32
    %31 = vector.broadcast %cst_24 : f32 to vector<8x16xf32>
    %32 = arith.maximumf %30, %31 : vector<8x16xf32>
    %c0_25 = arith.constant 0 : index
    %c0_26 = arith.constant 0 : index
    %33 = vector.load %arg11[%c0_25, %c0_26] : memref<16x32xf32, #tpu.memory_space<vmem>>, vector<16x32xf32>
    %cst_27 = arith.constant dense<0.000000e+00> : vector<8x32xf32>
    %34 = tpu.matmul %32, %33, %cst_27 {dimension_numbers = #tpu.dot_dimension_numbers<[1], [0], [0], [1], [0, 0, 1, 1], [], []>} : vector<8x16xf32>, vector<16x32xf32>, vector<8x32xf32> -> vector<8x32xf32>
    %c0_28 = arith.constant 0 : index
    %c0_29 = arith.constant 0 : index
    %35 = vector.load %arg12[%c0_28, %c0_29] : memref<1x32xf32, #tpu.memory_space<vmem>>, vector<1x32xf32>
    %36 = vector.broadcast %35 : vector<1x32xf32> to vector<8x32xf32>
    %37 = arith.addf %34, %36 : vector<8x32xf32>
    %cst_30 = arith.constant 0.000000e+00 : f32
    %38 = vector.broadcast %cst_30 : f32 to vector<8x32xf32>
    %39 = arith.maximumf %37, %38 : vector<8x32xf32>
    %c0_31 = arith.constant 0 : index
    %c0_32 = arith.constant 0 : index
    %40 = vector.load %arg13[%c0_31, %c0_32] : memref<32x1024xf32, #tpu.memory_space<vmem>>, vector<32x1024xf32>
    %cst_33 = arith.constant dense<0.000000e+00> : vector<8x1024xf32>
    %41 = tpu.matmul %39, %40, %cst_33 {dimension_numbers = #tpu.dot_dimension_numbers<[1], [0], [0], [1], [0, 0, 1, 1], [], []>} : vector<8x32xf32>, vector<32x1024xf32>, vector<8x1024xf32> -> vector<8x1024xf32>
    %c0_34 = arith.constant 0 : index
    %c0_35 = arith.constant 0 : index
    %42 = vector.load %arg14[%c0_34, %c0_35] : memref<1x1024xf32, #tpu.memory_space<vmem>>, vector<1x1024xf32>
    %43 = vector.broadcast %42 : vector<1x1024xf32> to vector<8x1024xf32>
    %44 = arith.addf %41, %43 : vector<8x1024xf32>
    %c0_36 = arith.constant 0 : index
    %c0_37 = arith.constant 0 : index
    %45 = vector.load %arg15[%c0_36, %c0_37] : memref<8x1024xf32, #tpu.memory_space<vmem>>, vector<8x1024xf32>
    tpu.vector_store %arg15[%c0_36, %c0_37], %44 {strides = array<i32>} : memref<8x1024xf32, #tpu.memory_space<vmem>>, vector<8x1024xf32>,
    %c0_38 = arith.constant 0 : index
    %c0_39 = arith.constant 0 : index
    %46 = vector.load %arg16[%c0_38, %c0_39] : memref<8x16xf32, #tpu.memory_space<vmem>>, vector<8x16xf32>
    tpu.vector_store %arg16[%c0_38, %c0_39], %19 {strides = array<i32>} : memref<8x16xf32, #tpu.memory_space<vmem>>, vector<8x16xf32>,
    return
  }
  func.func @transform_0(%arg0: i32) -> (i32, i32) {
    %c0_i32 = arith.constant 0 : i32
    %c0_i32_0 = arith.constant 0 : i32
    return %arg0, %c0_i32 : i32, i32
  }
  func.func @transform_1(%arg0: i32) -> (i32, i32) {
    %c0_i32 = arith.constant 0 : i32
    %c0_i32_0 = arith.constant 0 : i32
    return %arg0, %c0_i32 : i32, i32
  }
  func.func @transform_2(%arg0: i32) -> (i32, i32) {
    %c0_i32 = arith.constant 0 : i32
    %c0_i32_0 = arith.constant 0 : i32
    %c0_i32_1 = arith.constant 0 : i32
    return %c0_i32, %c0_i32_0 : i32, i32
  }
  func.func @transform_3(%arg0: i32) -> (i32, i32) {
    %c0_i32 = arith.constant 0 : i32
    %c0_i32_0 = arith.constant 0 : i32
    %c0_i32_1 = arith.constant 0 : i32
    return %c0_i32, %c0_i32_0 : i32, i32
  }
  func.func @transform_4(%arg0: i32) -> (i32, i32) {
    %c0_i32 = arith.constant 0 : i32
    %c0_i32_0 = arith.constant 0 : i32
    %c0_i32_1 = arith.constant 0 : i32
    return %c0_i32, %c0_i32_0 : i32, i32
  }
  func.func @transform_5(%arg0: i32) -> (i32, i32) {
    %c0_i32 = arith.constant 0 : i32
    %c0_i32_0 = arith.constant 0 : i32
    %c0_i32_1 = arith.constant 0 : i32
    return %c0_i32, %c0_i32_0 : i32, i32
  }
  func.func @transform_6(%arg0: i32) -> (i32, i32) {
    %c0_i32 = arith.constant 0 : i32
    %c0_i32_0 = arith.constant 0 : i32
    %c0_i32_1 = arith.constant 0 : i32
    return %c0_i32, %c0_i32_0 : i32, i32
  }
  func.func @transform_7(%arg0: i32) -> (i32, i32) {
    %c0_i32 = arith.constant 0 : i32
    %c0_i32_0 = arith.constant 0 : i32
    %c0_i32_1 = arith.constant 0 : i32
    return %c0_i32, %c0_i32_0 : i32, i32
  }
  func.func @transform_8(%arg0: i32) -> (i32, i32) {
    %c0_i32 = arith.constant 0 : i32
    %c0_i32_0 = arith.constant 0 : i32
    %c0_i32_1 = arith.constant 0 : i32
    return %c0_i32, %c0_i32_0 : i32, i32
  }
  func.func @transform_9(%arg0: i32) -> (i32, i32) {
    %c0_i32 = arith.constant 0 : i32
    %c0_i32_0 = arith.constant 0 : i32
    %c0_i32_1 = arith.constant 0 : i32
    return %c0_i32, %c0_i32_0 : i32, i32
  }
  func.func @transform_10(%arg0: i32) -> (i32, i32) {
    %c0_i32 = arith.constant 0 : i32
    %c0_i32_0 = arith.constant 0 : i32
    %c0_i32_1 = arith.constant 0 : i32
    return %c0_i32, %c0_i32_0 : i32, i32
  }
  func.func @transform_11(%arg0: i32) -> (i32, i32) {
    %c0_i32 = arith.constant 0 : i32
    %c0_i32_0 = arith.constant 0 : i32
    %c0_i32_1 = arith.constant 0 : i32
    return %c0_i32, %c0_i32_0 : i32, i32
  }
  func.func @transform_12(%arg0: i32) -> (i32, i32) {
    %c0_i32 = arith.constant 0 : i32
    %c0_i32_0 = arith.constant 0 : i32
    %c0_i32_1 = arith.constant 0 : i32
    return %c0_i32, %c0_i32_0 : i32, i32
  }
  func.func @transform_13(%arg0: i32) -> (i32, i32) {
    %c0_i32 = arith.constant 0 : i32
    %c0_i32_0 = arith.constant 0 : i32
    %c0_i32_1 = arith.constant 0 : i32
    return %c0_i32, %c0_i32_0 : i32, i32
  }
  func.func @transform_14(%arg0: i32) -> (i32, i32) {
    %c0_i32 = arith.constant 0 : i32
    %c0_i32_0 = arith.constant 0 : i32
    return %arg0, %c0_i32 : i32, i32
  }
  func.func @transform_15(%arg0: i32) -> (i32, i32) {
    %c0_i32 = arith.constant 0 : i32
    %c0_i32_0 = arith.constant 0 : i32
    return %arg0, %c0_i32 : i32, i32
  }
}

</mosaic_0001>

<llo_original>
// kernel: vae_forward.1
$region0: #{vae_forward.1}
  #allocation0 [shape = 'u32[]', space=smem, size = 0x4, offset = 0x4, fixed_abs, tag = 'smem constant byte address 0x4 - core index']
  #allocation1 [shape = 'u32[72,128]{1,0:T(1,128)}', space=vmem, size = 0x9000, scoped, tag = 'internal scratch']
  %s0 = inlined_call_operand.vmem [shape: f32[8,1024], index: 0, kind: input, shape index: {}]
  %s1 = inlined_call_operand.vmem [shape: f32[8,8], index: 1, kind: input, shape index: {}]
  %s2 = inlined_call_operand.vmem [shape: f32[1024,32], index: 2, kind: input, shape index: {}]
  %s3 = inlined_call_operand.vmem [shape: f32[1,32], index: 3, kind: input, shape index: {}]
  %s4 = inlined_call_operand.vmem [shape: f32[32,16], index: 4, kind: input, shape index: {}]
  %s5 = inlined_call_operand.vmem [shape: f32[1,16], index: 5, kind: input, shape index: {}]
  %s6 = inlined_call_operand.vmem [shape: f32[16,16], index: 6, kind: input, shape index: {}]
  %s7 = inlined_call_operand.vmem [shape: f32[1,16], index: 7, kind: input, shape index: {}]
  %s8 = inlined_call_operand.vmem [shape: f32[8,16], index: 8, kind: input, shape index: {}]
  %s9 = inlined_call_operand.vmem [shape: f32[1,16], index: 9, kind: input, shape index: {}]
  %s10 = inlined_call_operand.vmem [shape: f32[16,32], index: 10, kind: input, shape index: {}]
  %s11 = inlined_call_operand.vmem [shape: f32[1,32], index: 11, kind: input, shape index: {}]
  %s12 = inlined_call_operand.vmem [shape: f32[32,1024], index: 12, kind: input, shape index: {}]
  %s13 = inlined_call_operand.vmem [shape: f32[1,1024], index: 13, kind: input, shape index: {}]
  %s14 = inlined_call_operand.vmem [shape: f32[8,1024], index: 14, kind: output, shape index: {0}]
  %s15 = inlined_call_operand.vmem [shape: f32[8,16], index: 15, kind: output, shape index: {1}]
  %16 = xla_tuple %s14, %s15
  %s17 = sld [smem:[#allocation0]]
  $region74: #{vae_forward.1} parent=0
    _
  %s19 = ssub.s32 1, %s17
  %s20 = scalar_select 0, %s19, %s17
  // Predicated region
  $region2: #{vae_forward.1} parent=0 // pred_check
    _
  $region3: #{vae_forward.1} parent=0 // pred_check_branch
    %22 = sbr.rel (0) target = $region5
  $region4: #{vae_forward.1} parent=0 // pred_region
    _
  $region5: #{vae_forward.1} parent=0 // pred_fallthru
    _
  // Predicated region
  $region6: #{vae_forward.1} parent=0 // pred_check
    _
  $region7: #{vae_forward.1} parent=0 // pred_check_branch
    %24 = sbr.rel (0) target = $region9
  $region8: #{vae_forward.1} parent=0 // pred_region
    _
  $region9: #{vae_forward.1} parent=0 // pred_fallthru
    _
  // Predicated region
  $region10: #{vae_forward.1} parent=0 // pred_check
    _
  $region11: #{vae_forward.1} parent=0 // pred_check_branch
    %26 = sbr.rel (0) target = $region13
  $region12: #{vae_forward.1} parent=0 // pred_region
    _
  $region13: #{vae_forward.1} parent=0 // pred_fallthru
    _
  // Predicated region
  $region14: #{vae_forward.1} parent=0 // pred_check
    _
  $region15: #{vae_forward.1} parent=0 // pred_check_branch
    %28 = sbr.rel (0) target = $region17
  $region16: #{vae_forward.1} parent=0 // pred_region
    _
  $region17: #{vae_forward.1} parent=0 // pred_fallthru
    _
  // Predicated region
  $region18: #{vae_forward.1} parent=0 // pred_check
    _
  $region19: #{vae_forward.1} parent=0 // pred_check_branch
    %30 = sbr.rel (0) target = $region21
  $region20: #{vae_forward.1} parent=0 // pred_region
    _
  $region21: #{vae_forward.1} parent=0 // pred_fallthru
    _
  // Predicated region
  $region22: #{vae_forward.1} parent=0 // pred_check
    _
  $region23: #{vae_forward.1} parent=0 // pred_check_branch
    %32 = sbr.rel (0) target = $region25
  $region24: #{vae_forward.1} parent=0 // pred_region
    _
  $region25: #{vae_forward.1} parent=0 // pred_fallthru
    _
  // Predicated region
  $region26: #{vae_forward.1} parent=0 // pred_check
    _
  $region27: #{vae_forward.1} parent=0 // pred_check_branch
    %34 = sbr.rel (0) target = $region29
  $region28: #{vae_forward.1} parent=0 // pred_region
    _
  $region29: #{vae_forward.1} parent=0 // pred_fallthru
    _
  // Predicated region
  $region30: #{vae_forward.1} parent=0 // pred_check
    _
  $region31: #{vae_forward.1} parent=0 // pred_check_branch
    %36 = sbr.rel (0) target = $region33
  $region32: #{vae_forward.1} parent=0 // pred_region
    _
  $region33: #{vae_forward.1} parent=0 // pred_fallthru
    _
  // Predicated region
  $region34: #{vae_forward.1} parent=0 // pred_check
    _
  $region35: #{vae_forward.1} parent=0 // pred_check_branch
    %38 = sbr.rel (0) target = $region37
  $region36: #{vae_forward.1} parent=0 // pred_region
    _
  $region37: #{vae_forward.1} parent=0 // pred_fallthru
    _
  // Predicated region
  $region38: #{vae_forward.1} parent=0 // pred_check
    _
  $region39: #{vae_forward.1} parent=0 // pred_check_branch
    %40 = sbr.rel (0) target = $region41
  $region40: #{vae_forward.1} parent=0 // pred_region
    _
  $region41: #{vae_forward.1} parent=0 // pred_fallthru
    _
  // Predicated region
  $region42: #{vae_forward.1} parent=0 // pred_check
    _
  $region43: #{vae_forward.1} parent=0 // pred_check_branch
    %42 = sbr.rel (0) target = $region45
  $region44: #{vae_forward.1} parent=0 // pred_region
    _
  $region45: #{vae_forward.1} parent=0 // pred_fallthru
    _
  // Predicated region
  $region46: #{vae_forward.1} parent=0 // pred_check
    _
  $region47: #{vae_forward.1} parent=0 // pred_check_branch
    %44 = sbr.rel (0) target = $region49
  $region48: #{vae_forward.1} parent=0 // pred_region
    _
  $region49: #{vae_forward.1} parent=0 // pred_fallthru
    _
  // Predicated region
  $region50: #{vae_forward.1} parent=0 // pred_check
    _
  $region51: #{vae_forward.1} parent=0 // pred_check_branch
    %46 = sbr.rel (0) target = $region53
  $region52: #{vae_forward.1} parent=0 // pred_region
    _
  $region53: #{vae_forward.1} parent=0 // pred_fallthru
    _
  // Predicated region
  $region54: #{vae_forward.1} parent=0 // pred_check
    _
  $region55: #{vae_forward.1} parent=0 // pred_check_branch
    %48 = sbr.rel (0) target = $region57
  $region56: #{vae_forward.1} parent=0 // pred_region
    _
  $region57: #{vae_forward.1} parent=0 // pred_fallthru
    _
  %v49 = vld [vmem:[%s0] sm:$0xff]
  %v50 = vld [vmem:[%s0 + $0x8] sm:$0xff]
  %v51 = vld [vmem:[%s0 + $0x10] sm:$0xff]
  %v52 = vld [vmem:[%s0 + $0x18] sm:$0xff]
  %v53 = vld [vmem:[%s0 + $0x20] sm:$0xff]
  %v54 = vld [vmem:[%s0 + $0x28] sm:$0xff]
  %v55 = vld [vmem:[%s0 + $0x30] sm:$0xff]
  %v56 = vld [vmem:[%s0 + $0x38] sm:$0xff]
  %v57 = vld [vmem:[%s2] sm:$0xff]
  %v58 = vld [vmem:[%s2 + $0x8] sm:$0xff]
  %v59 = vld [vmem:[%s2 + $0x10] sm:$0xff]
  %v60 = vld [vmem:[%s2 + $0x18] sm:$0xff]
  %v61 = vld [vmem:[%s2 + $0x20] sm:$0xff]
  %v62 = vld [vmem:[%s2 + $0x28] sm:$0xff]
  %v63 = vld [vmem:[%s2 + $0x30] sm:$0xff]
  %v64 = vld [vmem:[%s2 + $0x38] sm:$0xff]
  %v65 = vld [vmem:[%s2 + $0x40] sm:$0xff]
  %v66 = vld [vmem:[%s2 + $0x48] sm:$0xff]
  %v67 = vld [vmem:[%s2 + $0x50] sm:$0xff]
  %v68 = vld [vmem:[%s2 + $0x58] sm:$0xff]
  %v69 = vld [vmem:[%s2 + $0x60] sm:$0xff]
  %v70 = vld [vmem:[%s2 + $0x68] sm:$0xff]
  %v71 = vld [vmem:[%s2 + $0x70] sm:$0xff]
  %v72 = vld [vmem:[%s2 + $0x78] sm:$0xff]
  %v73 = vld [vmem:[%s2 + $0x80] sm:$0xff]
  %v74 = vld [vmem:[%s2 + $0x88] sm:$0xff]
  %v75 = vld [vmem:[%s2 + $0x90] sm:$0xff]
  %v76 = vld [vmem:[%s2 + $0x98] sm:$0xff]
  %v77 = vld [vmem:[%s2 + $0xa0] sm:$0xff]
  %v78 = vld [vmem:[%s2 + $0xa8] sm:$0xff]
  %v79 = vld [vmem:[%s2 + $0xb0] sm:$0xff]
  %v80 = vld [vmem:[%s2 + $0xb8] sm:$0xff]
  %v81 = vld [vmem:[%s2 + $0xc0] sm:$0xff]
  %v82 = vld [vmem:[%s2 + $0xc8] sm:$0xff]
  %v83 = vld [vmem:[%s2 + $0xd0] sm:$0xff]
  %v84 = vld [vmem:[%s2 + $0xd8] sm:$0xff]
  %v85 = vld [vmem:[%s2 + $0xe0] sm:$0xff]
  %v86 = vld [vmem:[%s2 + $0xe8] sm:$0xff]
  %v87 = vld [vmem:[%s2 + $0xf0] sm:$0xff]
  %v88 = vld [vmem:[%s2 + $0xf8] sm:$0xff]
  %v89 = vld [vmem:[%s2 + $0x100] sm:$0xff]
  %v90 = vld [vmem:[%s2 + $0x108] sm:$0xff]
  %v91 = vld [vmem:[%s2 + $0x110] sm:$0xff]
  %v92 = vld [vmem:[%s2 + $0x118] sm:$0xff]
  %v93 = vld [vmem:[%s2 + $0x120] sm:$0xff]
  %v94 = vld [vmem:[%s2 + $0x128] sm:$0xff]
  %v95 = vld [vmem:[%s2 + $0x130] sm:$0xff]
  %v96 = vld [vmem:[%s2 + $0x138] sm:$0xff]
  %v97 = vld [vmem:[%s2 + $0x140] sm:$0xff]
  %v98 = vld [vmem:[%s2 + $0x148] sm:$0xff]
  %v99 = vld [vmem:[%s2 + $0x150] sm:$0xff]
  %v100 = vld [vmem:[%s2 + $0x158] sm:$0xff]
  %v101 = vld [vmem:[%s2 + $0x160] sm:$0xff]
  %v102 = vld [vmem:[%s2 + $0x168] sm:$0xff]
  %v103 = vld [vmem:[%s2 + $0x170] sm:$0xff]
  %v104 = vld [vmem:[%s2 + $0x178] sm:$0xff]
  %v105 = vld [vmem:[%s2 + $0x180] sm:$0xff]
  %v106 = vld [vmem:[%s2 + $0x188] sm:$0xff]
  %v107 = vld [vmem:[%s2 + $0x190] sm:$0xff]
  %v108 = vld [vmem:[%s2 + $0x198] sm:$0xff]
  %v109 = vld [vmem:[%s2 + $0x1a0] sm:$0xff]
  %v110 = vld [vmem:[%s2 + $0x1a8] sm:$0xff]
  %v111 = vld [vmem:[%s2 + $0x1b0] sm:$0xff]
  %v112 = vld [vmem:[%s2 + $0x1b8] sm:$0xff]
  %v113 = vld [vmem:[%s2 + $0x1c0] sm:$0xff]
  %v114 = vld [vmem:[%s2 + $0x1c8] sm:$0xff]
  %v115 = vld [vmem:[%s2 + $0x1d0] sm:$0xff]
  %v116 = vld [vmem:[%s2 + $0x1d8] sm:$0xff]
  %v117 = vld [vmem:[%s2 + $0x1e0] sm:$0xff]
  %v118 = vld [vmem:[%s2 + $0x1e8] sm:$0xff]
  %v119 = vld [vmem:[%s2 + $0x1f0] sm:$0xff]
  %v120 = vld [vmem:[%s2 + $0x1f8] sm:$0xff]
  %v121 = vld [vmem:[%s2 + $0x200] sm:$0xff]
  %v122 = vld [vmem:[%s2 + $0x208] sm:$0xff]
  %v123 = vld [vmem:[%s2 + $0x210] sm:$0xff]
  %v124 = vld [vmem:[%s2 + $0x218] sm:$0xff]
  %v125 = vld [vmem:[%s2 + $0x220] sm:$0xff]
  %v126 = vld [vmem:[%s2 + $0x228] sm:$0xff]
  %v127 = vld [vmem:[%s2 + $0x230] sm:$0xff]
  %v128 = vld [vmem:[%s2 + $0x238] sm:$0xff]
  %v129 = vld [vmem:[%s2 + $0x240] sm:$0xff]
  %v130 = vld [vmem:[%s2 + $0x248] sm:$0xff]
  %v131 = vld [vmem:[%s2 + $0x250] sm:$0xff]
  %v132 = vld [vmem:[%s2 + $0x258] sm:$0xff]
  %v133 = vld [vmem:[%s2 + $0x260] sm:$0xff]
  %v134 = vld [vmem:[%s2 + $0x268] sm:$0xff]
  %v135 = vld [vmem:[%s2 + $0x270] sm:$0xff]
  %v136 = vld [vmem:[%s2 + $0x278] sm:$0xff]
  %v137 = vld [vmem:[%s2 + $0x280] sm:$0xff]
  %v138 = vld [vmem:[%s2 + $0x288] sm:$0xff]
  %v139 = vld [vmem:[%s2 + $0x290] sm:$0xff]
  %v140 = vld [vmem:[%s2 + $0x298] sm:$0xff]
  %v141 = vld [vmem:[%s2 + $0x2a0] sm:$0xff]
  %v142 = vld [vmem:[%s2 + $0x2a8] sm:$0xff]
  %v143 = vld [vmem:[%s2 + $0x2b0] sm:$0xff]
  %v144 = vld [vmem:[%s2 + $0x2b8] sm:$0xff]
  %v145 = vld [vmem:[%s2 + $0x2c0] sm:$0xff]
  %v146 = vld [vmem:[%s2 + $0x2c8] sm:$0xff]
  %v147 = vld [vmem:[%s2 + $0x2d0] sm:$0xff]
  %v148 = vld [vmem:[%s2 + $0x2d8] sm:$0xff]
  %v149 = vld [vmem:[%s2 + $0x2e0] sm:$0xff]
  %v150 = vld [vmem:[%s2 + $0x2e8] sm:$0xff]
  %v151 = vld [vmem:[%s2 + $0x2f0] sm:$0xff]
  %v152 = vld [vmem:[%s2 + $0x2f8] sm:$0xff]
  %v153 = vld [vmem:[%s2 + $0x300] sm:$0xff]
  %v154 = vld [vmem:[%s2 + $0x308] sm:$0xff]
  %v155 = vld [vmem:[%s2 + $0x310] sm:$0xff]
  %v156 = vld [vmem:[%s2 + $0x318] sm:$0xff]
  %v157 = vld [vmem:[%s2 + $0x320] sm:$0xff]
  %v158 = vld [vmem:[%s2 + $0x328] sm:$0xff]
  %v159 = vld [vmem:[%s2 + $0x330] sm:$0xff]
  %v160 = vld [vmem:[%s2 + $0x338] sm:$0xff]
  %v161 = vld [vmem:[%s2 + $0x340] sm:$0xff]
  %v162 = vld [vmem:[%s2 + $0x348] sm:$0xff]
  %v163 = vld [vmem:[%s2 + $0x350] sm:$0xff]
  %v164 = vld [vmem:[%s2 + $0x358] sm:$0xff]
  %v165 = vld [vmem:[%s2 + $0x360] sm:$0xff]
  %v166 = vld [vmem:[%s2 + $0x368] sm:$0xff]
  %v167 = vld [vmem:[%s2 + $0x370] sm:$0xff]
  %v168 = vld [vmem:[%s2 + $0x378] sm:$0xff]
  %v169 = vld [vmem:[%s2 + $0x380] sm:$0xff]
  %v170 = vld [vmem:[%s2 + $0x388] sm:$0xff]
  %v171 = vld [vmem:[%s2 + $0x390] sm:$0xff]
  %v172 = vld [vmem:[%s2 + $0x398] sm:$0xff]
  %v173 = vld [vmem:[%s2 + $0x3a0] sm:$0xff]
  %v174 = vld [vmem:[%s2 + $0x3a8] sm:$0xff]
  %v175 = vld [vmem:[%s2 + $0x3b0] sm:$0xff]
  %v176 = vld [vmem:[%s2 + $0x3b8] sm:$0xff]
  %v177 = vld [vmem:[%s2 + $0x3c0] sm:$0xff]
  %v178 = vld [vmem:[%s2 + $0x3c8] sm:$0xff]
  %v179 = vld [vmem:[%s2 + $0x3d0] sm:$0xff]
  %v180 = vld [vmem:[%s2 + $0x3d8] sm:$0xff]
  %v181 = vld [vmem:[%s2 + $0x3e0] sm:$0xff]
  %v182 = vld [vmem:[%s2 + $0x3e8] sm:$0xff]
  %v183 = vld [vmem:[%s2 + $0x3f0] sm:$0xff]
  %v184 = vld [vmem:[%s2 + $0x3f8] sm:$0xff]
  %v185 = vld [vmem:[%s3] sm:$0x1]
  %v187 = vperm.slane %v185, 0
  %189 = vmatpush.msra.mxu0 %v72
  %190 = vmatpush.msra.mxu0 %v71
  %191 = vmatpush.msra.mxu0 %v70
  %192 = vmatpush.msra.mxu0 %v69
  %193 = vmatpush.msra.mxu0 %v68
  %194 = vmatpush.msra.mxu0 %v67
  %195 = vmatpush.msra.mxu0 %v66
  %196 = vmatpush.msra.mxu0 %v65
  %197 = vmatpush.msra.mxu0 %v64
  %198 = vmatpush.msra.mxu0 %v63
  %199 = vmatpush.msra.mxu0 %v62
  %200 = vmatpush.msra.mxu0 %v61
  %201 = vmatpush.msra.mxu0 %v60
  %202 = vmatpush.msra.mxu0 %v59
  %203 = vmatpush.msra.mxu0 %v58
  %204 = vmatpush.msra.mxu0 %v57
  %205 = vmatmul.f32.gmra.mxu0 %v49
  %v206 = vpop.f32.mrf.mxu0
  %v207 = vadd.f32 %v187, %v206
  %208 = vdwg.mxu0
  %209 = vmatpush.msra.mxu0 %v88
  %210 = vmatpush.msra.mxu0 %v87
  %211 = vmatpush.msra.mxu0 %v86
  %212 = vmatpush.msra.mxu0 %v85
  %213 = vmatpush.msra.mxu0 %v84
  %214 = vmatpush.msra.mxu0 %v83
  %215 = vmatpush.msra.mxu0 %v82
  %216 = vmatpush.msra.mxu0 %v81
  %217 = vmatpush.msra.mxu0 %v80
  %218 = vmatpush.msra.mxu0 %v79
  %219 = vmatpush.msra.mxu0 %v78
  %220 = vmatpush.msra.mxu0 %v77
  %221 = vmatpush.msra.mxu0 %v76
  %222 = vmatpush.msra.mxu0 %v75
  %223 = vmatpush.msra.mxu0 %v74
  %224 = vmatpush.msra.mxu0 %v73
  %225 = vmatmul.f32.gmra.mxu0 %v50
  %v226 = vpop.f32.mrf.mxu0
  %v227 = vadd.f32 %v207, %v226
  %228 = vdwg.mxu0
  %229 = vmatpush.msra.mxu0 %v104
  %230 = vmatpush.msra.mxu0 %v103
  %231 = vmatpush.msra.mxu0 %v102
  %232 = vmatpush.msra.mxu0 %v101
  %233 = vmatpush.msra.mxu0 %v100
  %234 = vmatpush.msra.mxu0 %v99
  %235 = vmatpush.msra.mxu0 %v98
  %236 = vmatpush.msra.mxu0 %v97
  %237 = vmatpush.msra.mxu0 %v96
  %238 = vmatpush.msra.mxu0 %v95
  %239 = vmatpush.msra.mxu0 %v94
  %240 = vmatpush.msra.mxu0 %v93
  %241 = vmatpush.msra.mxu0 %v92
  %242 = vmatpush.msra.mxu0 %v91
  %243 = vmatpush.msra.mxu0 %v90
  %244 = vmatpush.msra.mxu0 %v89
  %245 = vmatmul.f32.gmra.mxu0 %v51
  %v246 = vpop.f32.mrf.mxu0
  %v247 = vadd.f32 %v227, %v246
  %248 = vdwg.mxu0
  %249 = vmatpush.msra.mxu0 %v120
  %250 = vmatpush.msra.mxu0 %v119
  %251 = vmatpush.msra.mxu0 %v118
  %252 = vmatpush.msra.mxu0 %v117
  %253 = vmatpush.msra.mxu0 %v116
  %254 = vmatpush.msra.mxu0 %v115
  %255 = vmatpush.msra.mxu0 %v114
  %256 = vmatpush.msra.mxu0 %v113
  %257 = vmatpush.msra.mxu0 %v112
  %258 = vmatpush.msra.mxu0 %v111
  %259 = vmatpush.msra.mxu0 %v110
  %260 = vmatpush.msra.mxu0 %v109
  %261 = vmatpush.msra.mxu0 %v108
  %262 = vmatpush.msra.mxu0 %v107
  %263 = vmatpush.msra.mxu0 %v106
  %264 = vmatpush.msra.mxu0 %v105
  %265 = vmatmul.f32.gmra.mxu0 %v52
  %v266 = vpop.f32.mrf.mxu0
  %v267 = vadd.f32 %v247, %v266
  %268 = vdwg.mxu0
  %269 = vmatpush.msra.mxu0 %v136
  %270 = vmatpush.msra.mxu0 %v135
  %271 = vmatpush.msra.mxu0 %v134
  %272 = vmatpush.msra.mxu0 %v133
  %273 = vmatpush.msra.mxu0 %v132
  %274 = vmatpush.msra.mxu0 %v131
  %275 = vmatpush.msra.mxu0 %v130
  %276 = vmatpush.msra.mxu0 %v129
  %277 = vmatpush.msra.mxu0 %v128
  %278 = vmatpush.msra.mxu0 %v127
  %279 = vmatpush.msra.mxu0 %v126
  %280 = vmatpush.msra.mxu0 %v125
  %281 = vmatpush.msra.mxu0 %v124
  %282 = vmatpush.msra.mxu0 %v123
  %283 = vmatpush.msra.mxu0 %v122
  %284 = vmatpush.msra.mxu0 %v121
  %285 = vmatmul.f32.gmra.mxu0 %v53
  %v286 = vpop.f32.mrf.mxu0
  %v287 = vadd.f32 %v267, %v286
  %288 = vdwg.mxu0
  %289 = vmatpush.msra.mxu0 %v152
  %290 = vmatpush.msra.mxu0 %v151
  %291 = vmatpush.msra.mxu0 %v150
  %292 = vmatpush.msra.mxu0 %v149
  %293 = vmatpush.msra.mxu0 %v148
  %294 = vmatpush.msra.mxu0 %v147
  %295 = vmatpush.msra.mxu0 %v146
  %296 = vmatpush.msra.mxu0 %v145
  %297 = vmatpush.msra.mxu0 %v144
  %298 = vmatpush.msra.mxu0 %v143
  %299 = vmatpush.msra.mxu0 %v142
  %300 = vmatpush.msra.mxu0 %v141
  %301 = vmatpush.msra.mxu0 %v140
  %302 = vmatpush.msra.mxu0 %v139
  %303 = vmatpush.msra.mxu0 %v138
  %304 = vmatpush.msra.mxu0 %v137
  %305 = vmatmul.f32.gmra.mxu0 %v54
  %v306 = vpop.f32.mrf.mxu0
  %v307 = vadd.f32 %v287, %v306
  %308 = vdwg.mxu0
  %309 = vmatpush.msra.mxu0 %v168
  %310 = vmatpush.msra.mxu0 %v167
  %311 = vmatpush.msra.mxu0 %v166
  %312 = vmatpush.msra.mxu0 %v165
  %313 = vmatpush.msra.mxu0 %v164
  %314 = vmatpush.msra.mxu0 %v163
  %315 = vmatpush.msra.mxu0 %v162
  %316 = vmatpush.msra.mxu0 %v161
  %317 = vmatpush.msra.mxu0 %v160
  %318 = vmatpush.msra.mxu0 %v159
  %319 = vmatpush.msra.mxu0 %v158
  %320 = vmatpush.msra.mxu0 %v157
  %321 = vmatpush.msra.mxu0 %v156
  %322 = vmatpush.msra.mxu0 %v155
  %323 = vmatpush.msra.mxu0 %v154
  %324 = vmatpush.msra.mxu0 %v153
  %325 = vmatmul.f32.gmra.mxu0 %v55
  %v326 = vpop.f32.mrf.mxu0
  %v327 = vadd.f32 %v307, %v326
  %328 = vdwg.mxu0
  %329 = vmatpush.msra.mxu0 %v184
  %330 = vmatpush.msra.mxu0 %v183
  %331 = vmatpush.msra.mxu0 %v182
  %332 = vmatpush.msra.mxu0 %v181
  %333 = vmatpush.msra.mxu0 %v180
  %334 = vmatpush.msra.mxu0 %v179
  %335 = vmatpush.msra.mxu0 %v178
  %336 = vmatpush.msra.mxu0 %v177
  %337 = vmatpush.msra.mxu0 %v176
  %338 = vmatpush.msra.mxu0 %v175
  %339 = vmatpush.msra.mxu0 %v174
  %340 = vmatpush.msra.mxu0 %v173
  %341 = vmatpush.msra.mxu0 %v172
  %342 = vmatpush.msra.mxu0 %v171
  %343 = vmatpush.msra.mxu0 %v170
  %344 = vmatpush.msra.mxu0 %v169
  %345 = vmatmul.f32.gmra.mxu0 %v56
  %v346 = vpop.f32.mrf.mxu0
  %v347 = vadd.f32 %v327, %v346
  %348 = vdwg.mxu0
  %v349 = vmax.f32 %v347, 0.0
  %v350 = vld [vmem:[%s4] sm:$0xff]
  %v351 = vld [vmem:[%s4 + $0x8] sm:$0xff]
  %v352 = vld [vmem:[%s4 + $0x10] sm:$0xff]
  %v353 = vld [vmem:[%s4 + $0x18] sm:$0xff]
  %v354 = vld [vmem:[%s5] sm:$0x1]
  %v356 = vperm.slane %v354, 0
  %vm358 = vcmask 261120
  %v360 = vsel %vm358, %v349, 0
  %362 = vmatpush.msra.mxu0 0.0
  %363 = vmatpush.msra.mxu0 0.0
  %364 = vmatpush.msra.mxu0 0.0
  %365 = vmatpush.msra.mxu0 0.0
  %366 = vmatpush.msra.mxu0 0.0
  %367 = vmatpush.msra.mxu0 0.0
  %368 = vmatpush.msra.mxu0 0.0
  %369 = vmatpush.msra.mxu0 0.0
  %370 = vmatpush.msra.mxu0 0.0
  %371 = vmatpush.msra.mxu0 0.0
  %372 = vmatpush.msra.mxu0 0.0
  %373 = vmatpush.msra.mxu0 0.0
  %374 = vmatpush.msra.mxu0 %v353
  %375 = vmatpush.msra.mxu0 %v352
  %376 = vmatpush.msra.mxu0 %v351
  %377 = vmatpush.msra.mxu0 %v350
  %378 = vmatmul.f32.gmra.mxu0 %v360
  %v379 = vpop.f32.mrf.mxu0
  %v380 = vadd.f32 %v356, %v379
  %381 = vdwg.mxu0
  %v382 = vmax.f32 %v380, 0.0
  %v383 = vld [vmem:[%s6] sm:$0xff]
  %v384 = vld [vmem:[%s6 + $0x8] sm:$0xff]
  %v385 = vld [vmem:[%s7] sm:$0x1]
  %v387 = vperm.slane %v385, 0
  %vm389 = vcmask 130048
  %v391 = vsel %vm389, %v382, 0
  %393 = vmatpush.msra.mxu0 0.0
  %394 = vmatpush.msra.mxu0 0.0
  %395 = vmatpush.msra.mxu0 0.0
  %396 = vmatpush.msra.mxu0 0.0
  %397 = vmatpush.msra.mxu0 0.0
  %398 = vmatpush.msra.mxu0 0.0
  %399 = vmatpush.msra.mxu0 0.0
  %400 = vmatpush.msra.mxu0 0.0
  %401 = vmatpush.msra.mxu0 0.0
  %402 = vmatpush.msra.mxu0 0.0
  %403 = vmatpush.msra.mxu0 0.0
  %404 = vmatpush.msra.mxu0 0.0
  %405 = vmatpush.msra.mxu0 0.0
  %406 = vmatpush.msra.mxu0 0.0
  %407 = vmatpush.msra.mxu0 %v384
  %408 = vmatpush.msra.mxu0 %v383
  %409 = vmatmul.f32.gmra.mxu0 %v391
  %v410 = vpop.f32.mrf.mxu0
  %v411 = vadd.f32 %v387, %v410
  %412 = vdwg.mxu0
  %v413 = vmul.f32 %v411, 1.442695
  %v414 = vpow.pop %v413
  %v415 = vld [vmem:[%s1] sm:$0xff]
  %417 = vrot.lane.b32.xlu0 %v415, 8
  %v418 = vpop.permute.xlu0 %417
  %v420 = vmul.f32 %v414, %v418
  %422 = vrot.lane.b32.xlu0 %v420, 120
  %v423 = vpop.permute.xlu0 %422
  %v425 = vadd.f32 %v411, %v423
  %v426 = vld [vmem:[%s8] sm:$0xff]
  %v427 = vld [vmem:[%s9] sm:$0x1]
  %v429 = vperm.slane %v427, 0
  %vm431 = vcmask 64512
  %v433 = vsel %vm431, %v425, 0
  %435 = vmatpush.msra.mxu0 0.0
  %436 = vmatpush.msra.mxu0 0.0
  %437 = vmatpush.msra.mxu0 0.0
  %438 = vmatpush.msra.mxu0 0.0
  %439 = vmatpush.msra.mxu0 0.0
  %440 = vmatpush.msra.mxu0 0.0
  %441 = vmatpush.msra.mxu0 0.0
  %442 = vmatpush.msra.mxu0 0.0
  %443 = vmatpush.msra.mxu0 0.0
  %444 = vmatpush.msra.mxu0 0.0
  %445 = vmatpush.msra.mxu0 0.0
  %446 = vmatpush.msra.mxu0 0.0
  %447 = vmatpush.msra.mxu0 0.0
  %448 = vmatpush.msra.mxu0 0.0
  %449 = vmatpush.msra.mxu0 0.0
  %450 = vmatpush.msra.mxu0 %v426
  %451 = vmatmul.f32.gmra.mxu0 %v433
  %v452 = vpop.f32.mrf.mxu0
  %v453 = vadd.f32 %v429, %v452
  %454 = vdwg.mxu0
  %v455 = vmax.f32 %v453, 0.0
  %v456 = vld [vmem:[%s10] sm:$0xff]
  %v457 = vld [vmem:[%s10 + $0x8] sm:$0xff]
  %v458 = vld [vmem:[%s11] sm:$0x1]
  %v460 = vperm.slane %v458, 0
  %v463 = vsel %vm389, %v455, 0
  %465 = vmatpush.msra.mxu0 0.0
  %466 = vmatpush.msra.mxu0 0.0
  %467 = vmatpush.msra.mxu0 0.0
  %468 = vmatpush.msra.mxu0 0.0
  %469 = vmatpush.msra.mxu0 0.0
  %470 = vmatpush.msra.mxu0 0.0
  %471 = vmatpush.msra.mxu0 0.0
  %472 = vmatpush.msra.mxu0 0.0
  %473 = vmatpush.msra.mxu0 0.0
  %474 = vmatpush.msra.mxu0 0.0
  %475 = vmatpush.msra.mxu0 0.0
  %476 = vmatpush.msra.mxu0 0.0
  %477 = vmatpush.msra.mxu0 0.0
  %478 = vmatpush.msra.mxu0 0.0
  %479 = vmatpush.msra.mxu0 %v457
  %480 = vmatpush.msra.mxu0 %v456
  %481 = vmatmul.f32.gmra.mxu0 %v463
  %v482 = vpop.f32.mrf.mxu0
  %v483 = vadd.f32 %v460, %v482
  %484 = vdwg.mxu0
  %v485 = vmax.f32 %v483, 0.0
  %v486 = vld [vmem:[%s12] sm:$0xff]
  %v487 = vld [vmem:[%s12 + $0x8] sm:$0xff]
  %v488 = vld [vmem:[%s12 + $0x10] sm:$0xff]
  %v489 = vld [vmem:[%s12 + $0x18] sm:$0xff]
  %v490 = vld [vmem:[%s12 + $0x20] sm:$0xff]
  %v491 = vld [vmem:[%s12 + $0x28] sm:$0xff]
  %v492 = vld [vmem:[%s12 + $0x30] sm:$0xff]
  %v493 = vld [vmem:[%s12 + $0x38] sm:$0xff]
  %v494 = vld [vmem:[%s12 + $0x40] sm:$0xff]
  %v495 = vld [vmem:[%s12 + $0x48] sm:$0xff]
  %v496 = vld [vmem:[%s12 + $0x50] sm:$0xff]
  %v497 = vld [vmem:[%s12 + $0x58] sm:$0xff]
  %v498 = vld [vmem:[%s12 + $0x60] sm:$0xff]
  %v499 = vld [vmem:[%s12 + $0x68] sm:$0xff]
  %v500 = vld [vmem:[%s12 + $0x70] sm:$0xff]
  %v501 = vld [vmem:[%s12 + $0x78] sm:$0xff]
  %v502 = vld [vmem:[%s12 + $0x80] sm:$0xff]
  %v503 = vld [vmem:[%s12 + $0x88] sm:$0xff]
  %v504 = vld [vmem:[%s12 + $0x90] sm:$0xff]
  %v505 = vld [vmem:[%s12 + $0x98] sm:$0xff]
  %v506 = vld [vmem:[%s12 + $0xa0] sm:$0xff]
  %v507 = vld [vmem:[%s12 + $0xa8] sm:$0xff]
  %v508 = vld [vmem:[%s12 + $0xb0] sm:$0xff]
  %v509 = vld [vmem:[%s12 + $0xb8] sm:$0xff]
  %v510 = vld [vmem:[%s12 + $0xc0] sm:$0xff]
  %v511 = vld [vmem:[%s12 + $0xc8] sm:$0xff]
  %v512 = vld [vmem:[%s12 + $0xd0] sm:$0xff]
  %v513 = vld [vmem:[%s12 + $0xd8] sm:$0xff]
  %v514 = vld [vmem:[%s12 + $0xe0] sm:$0xff]
  %v515 = vld [vmem:[%s12 + $0xe8] sm:$0xff]
  %v516 = vld [vmem:[%s12 + $0xf0] sm:$0xff]
  %v517 = vld [vmem:[%s12 + $0xf8] sm:$0xff]
  %v518 = vld [vmem:[%s13] sm:$0xff]
  %v520 = vperm.slane %v518, 0
  %v521 = vperm.slane %v518, 1
  %v522 = vperm.slane %v518, 2
  %v523 = vperm.slane %v518, 3
  %v524 = vperm.slane %v518, 4
  %v525 = vperm.slane %v518, 5
  %v526 = vperm.slane %v518, 6
  %v527 = vperm.slane %v518, 7
  %v537 = vsel %vm358, %v485, 0
  %539 = vmatpush.msra.mxu0 0.0
  %540 = vmatpush.msra.mxu0 0.0
  %541 = vmatpush.msra.mxu0 0.0
  %542 = vmatpush.msra.mxu0 0.0
  %543 = vmatpush.msra.mxu0 0.0
  %544 = vmatpush.msra.mxu0 0.0
  %545 = vmatpush.msra.mxu0 0.0
  %546 = vmatpush.msra.mxu0 0.0
  %547 = vmatpush.msra.mxu0 0.0
  %548 = vmatpush.msra.mxu0 0.0
  %549 = vmatpush.msra.mxu0 0.0
  %550 = vmatpush.msra.mxu0 0.0
  %551 = vmatpush.msra.mxu0 %v510
  %552 = vmatpush.msra.mxu0 %v502
  %553 = vmatpush.msra.mxu0 %v494
  %554 = vmatpush.msra.mxu0 %v486
  %555 = vmatmul.f32.gmra.mxu0 %v537
  %v556 = vpop.f32.mrf.mxu0
  %v557 = vadd.f32 %v520, %v556
  %558 = vdwg.mxu0
  %559 = vmatpush.msra.mxu0 0.0
  %560 = vmatpush.msra.mxu0 0.0
  %561 = vmatpush.msra.mxu0 0.0
  %562 = vmatpush.msra.mxu0 0.0
  %563 = vmatpush.msra.mxu0 0.0
  %564 = vmatpush.msra.mxu0 0.0
  %565 = vmatpush.msra.mxu0 0.0
  %566 = vmatpush.msra.mxu0 0.0
  %567 = vmatpush.msra.mxu0 0.0
  %568 = vmatpush.msra.mxu0 0.0
  %569 = vmatpush.msra.mxu0 0.0
  %570 = vmatpush.msra.mxu0 0.0
  %571 = vmatpush.msra.mxu0 %v511
  %572 = vmatpush.msra.mxu0 %v503
  %573 = vmatpush.msra.mxu0 %v495
  %574 = vmatpush.msra.mxu0 %v487
  %575 = vmatmul.f32.gmra.mxu0 %v537
  %v576 = vpop.f32.mrf.mxu0
  %v577 = vadd.f32 %v521, %v576
  %578 = vdwg.mxu0
  %579 = vmatpush.msra.mxu0 0.0
  %580 = vmatpush.msra.mxu0 0.0
  %581 = vmatpush.msra.mxu0 0.0
  %582 = vmatpush.msra.mxu0 0.0
  %583 = vmatpush.msra.mxu0 0.0
  %584 = vmatpush.msra.mxu0 0.0
  %585 = vmatpush.msra.mxu0 0.0
  %586 = vmatpush.msra.mxu0 0.0
  %587 = vmatpush.msra.mxu0 0.0
  %588 = vmatpush.msra.mxu0 0.0
  %589 = vmatpush.msra.mxu0 0.0
  %590 = vmatpush.msra.mxu0 0.0
  %591 = vmatpush.msra.mxu0 %v512
  %592 = vmatpush.msra.mxu0 %v504
  %593 = vmatpush.msra.mxu0 %v496
  %594 = vmatpush.msra.mxu0 %v488
  %595 = vmatmul.f32.gmra.mxu0 %v537
  %v596 = vpop.f32.mrf.mxu0
  %v597 = vadd.f32 %v522, %v596
  %598 = vdwg.mxu0
  %599 = vmatpush.msra.mxu0 0.0
  %600 = vmatpush.msra.mxu0 0.0
  %601 = vmatpush.msra.mxu0 0.0
  %602 = vmatpush.msra.mxu0 0.0
  %603 = vmatpush.msra.mxu0 0.0
  %604 = vmatpush.msra.mxu0 0.0
  %605 = vmatpush.msra.mxu0 0.0
  %606 = vmatpush.msra.mxu0 0.0
  %607 = vmatpush.msra.mxu0 0.0
  %608 = vmatpush.msra.mxu0 0.0
  %609 = vmatpush.msra.mxu0 0.0
  %610 = vmatpush.msra.mxu0 0.0
  %611 = vmatpush.msra.mxu0 %v513
  %612 = vmatpush.msra.mxu0 %v505
  %613 = vmatpush.msra.mxu0 %v497
  %614 = vmatpush.msra.mxu0 %v489
  %615 = vmatmul.f32.gmra.mxu0 %v537
  %v616 = vpop.f32.mrf.mxu0
  %v617 = vadd.f32 %v523, %v616
  %618 = vdwg.mxu0
  %619 = vmatpush.msra.mxu0 0.0
  %620 = vmatpush.msra.mxu0 0.0
  %621 = vmatpush.msra.mxu0 0.0
  %622 = vmatpush.msra.mxu0 0.0
  %623 = vmatpush.msra.mxu0 0.0
  %624 = vmatpush.msra.mxu0 0.0
  %625 = vmatpush.msra.mxu0 0.0
  %626 = vmatpush.msra.mxu0 0.0
  %627 = vmatpush.msra.mxu0 0.0
  %628 = vmatpush.msra.mxu0 0.0
  %629 = vmatpush.msra.mxu0 0.0
  %630 = vmatpush.msra.mxu0 0.0
  %631 = vmatpush.msra.mxu0 %v514
  %632 = vmatpush.msra.mxu0 %v506
  %633 = vmatpush.msra.mxu0 %v498
  %634 = vmatpush.msra.mxu0 %v490
  %635 = vmatmul.f32.gmra.mxu0 %v537
  %v636 = vpop.f32.mrf.mxu0
  %v637 = vadd.f32 %v524, %v636
  %638 = vdwg.mxu0
  %639 = vmatpush.msra.mxu0 0.0
  %640 = vmatpush.msra.mxu0 0.0
  %641 = vmatpush.msra.mxu0 0.0
  %642 = vmatpush.msra.mxu0 0.0
  %643 = vmatpush.msra.mxu0 0.0
  %644 = vmatpush.msra.mxu0 0.0
  %645 = vmatpush.msra.mxu0 0.0
  %646 = vmatpush.msra.mxu0 0.0
  %647 = vmatpush.msra.mxu0 0.0
  %648 = vmatpush.msra.mxu0 0.0
  %649 = vmatpush.msra.mxu0 0.0
  %650 = vmatpush.msra.mxu0 0.0
  %651 = vmatpush.msra.mxu0 %v515
  %652 = vmatpush.msra.mxu0 %v507
  %653 = vmatpush.msra.mxu0 %v499
  %654 = vmatpush.msra.mxu0 %v491
  %655 = vmatmul.f32.gmra.mxu0 %v537
  %v656 = vpop.f32.mrf.mxu0
  %v657 = vadd.f32 %v525, %v656
  %658 = vdwg.mxu0
  %659 = vmatpush.msra.mxu0 0.0
  %660 = vmatpush.msra.mxu0 0.0
  %661 = vmatpush.msra.mxu0 0.0
  %662 = vmatpush.msra.mxu0 0.0
  %663 = vmatpush.msra.mxu0 0.0
  %664 = vmatpush.msra.mxu0 0.0
  %665 = vmatpush.msra.mxu0 0.0
  %666 = vmatpush.msra.mxu0 0.0
  %667 = vmatpush.msra.mxu0 0.0
  %668 = vmatpush.msra.mxu0 0.0
  %669 = vmatpush.msra.mxu0 0.0
  %670 = vmatpush.msra.mxu0 0.0
  %671 = vmatpush.msra.mxu0 %v516
  %672 = vmatpush.msra.mxu0 %v508
  %673 = vmatpush.msra.mxu0 %v500
  %674 = vmatpush.msra.mxu0 %v492
  %675 = vmatmul.f32.gmra.mxu0 %v537
  %v676 = vpop.f32.mrf.mxu0
  %v677 = vadd.f32 %v526, %v676
  %678 = vdwg.mxu0
  %679 = vmatpush.msra.mxu0 0.0
  %680 = vmatpush.msra.mxu0 0.0
  %681 = vmatpush.msra.mxu0 0.0
  %682 = vmatpush.msra.mxu0 0.0
  %683 = vmatpush.msra.mxu0 0.0
  %684 = vmatpush.msra.mxu0 0.0
  %685 = vmatpush.msra.mxu0 0.0
  %686 = vmatpush.msra.mxu0 0.0
  %687 = vmatpush.msra.mxu0 0.0
  %688 = vmatpush.msra.mxu0 0.0
  %689 = vmatpush.msra.mxu0 0.0
  %690 = vmatpush.msra.mxu0 0.0
  %691 = vmatpush.msra.mxu0 %v517
  %692 = vmatpush.msra.mxu0 %v509
  %693 = vmatpush.msra.mxu0 %v501
  %694 = vmatpush.msra.mxu0 %v493
  %695 = vmatmul.f32.gmra.mxu0 %v537
  %v696 = vpop.f32.mrf.mxu0
  %v697 = vadd.f32 %v527, %v696
  %698 = vdwg.mxu0
  %699 = vst [vmem:[%s14] sm:$0xff] %v557
  %700 = vst [vmem:[%s14 + $0x8] sm:$0xff] %v577
  %701 = vst [vmem:[%s14 + $0x10] sm:$0xff] %v597
  %702 = vst [vmem:[%s14 + $0x18] sm:$0xff] %v617
  %703 = vst [vmem:[%s14 + $0x20] sm:$0xff] %v637
  %704 = vst [vmem:[%s14 + $0x28] sm:$0xff] %v657
  %705 = vst [vmem:[%s14 + $0x30] sm:$0xff] %v677
  %706 = vst [vmem:[%s14 + $0x38] sm:$0xff] %v697
  %707 = vst.msk [vmem:[%s15] sm:$0xff] %vm389, %v411
  // Predicated region
  $region58: #{vae_forward.1} parent=0 // pred_check
    _
  $region59: #{vae_forward.1} parent=0 // pred_check_branch
    %709 = sbr.rel (0) target = $region61
  $region60: #{vae_forward.1} parent=0 // pred_region
    _
  $region61: #{vae_forward.1} parent=0 // pred_fallthru
    _
  // Predicated region
  $region62: #{vae_forward.1} parent=0 // pred_check
    _
  $region63: #{vae_forward.1} parent=0 // pred_check_branch
    %711 = sbr.rel (0) target = $region65
  $region64: #{vae_forward.1} parent=0 // pred_region
    _
  $region65: #{vae_forward.1} parent=0 // pred_fallthru
    _
  // Predicated region
  $region66: #{vae_forward.1} parent=0 // pred_check
    _
  $region67: #{vae_forward.1} parent=0 // pred_check_branch
    %713 = sbr.rel (0) target = $region69
  $region68: #{vae_forward.1} parent=0 // pred_region
    _
  $region69: #{vae_forward.1} parent=0 // pred_fallthru
    _
  // Predicated region
  $region70: #{vae_forward.1} parent=0 // pred_check
    _
  $region71: #{vae_forward.1} parent=0 // pred_check_branch
    %715 = sbr.rel (0) target = $region73
  $region72: #{vae_forward.1} parent=0 // pred_region
    _
  $region73: #{vae_forward.1} parent=0 // pred_fallthru
    _

</llo_original>
